<compile_context>
chip_gen: v6e
topology: v6e:2x2x1
jax: 0.10.0
libtpu: 0.0.40
codegen_flags: <defaults>
</compile_context>

<pallas_src>
import jax
import jax.numpy as jnp
from jax.experimental import pallas as pl
from jax.experimental.pallas import tpu as pltpu


def _stable_softplus(x):
    # == log(1 + exp(x)), but stable for large |x|.
    return jnp.maximum(x, 0.0) + jnp.log(1.0 + jnp.exp(-jnp.abs(x)))


def _negbin_kernel(h_ref, w_ref, b_ref, out_ref):
    # h_ref:   (tb, H)  VMEM   batch tile of hidden states (streamed)
    # w_ref:   (H, 2)   VMEM   fused [W_mu | W_sigma], constant index map (resident)
    # b_ref:   (2,)     SMEM   fused [b_mu, b_sigma] scalars
    # out_ref: (2, tb)  VMEM   lane-dense output slab: row 0 = mu, row 1 = alpha
    lin = jnp.dot(h_ref[...], w_ref[...],
                  preferred_element_type=jnp.float32)         # (tb, 2): one MXU pass
    lin_t = lin.T                                             # (2, tb): XLU relayout so the
                                                              # EUP/store work is lane-dense
    row = jax.lax.broadcasted_iota(jnp.int32, (2, 1), 0)      # [[0], [1]]
    bias = jnp.where(row == 0, b_ref[0], b_ref[1])            # (2, 1) from SMEM scalars
    eps = jnp.where(row == 0, 0.0, 1e-5)                      # +1e-5 on the alpha row only
    out_ref[...] = (_stable_softplus(lin_t + bias) + eps).astype(out_ref.dtype)


def _round_up(x, m):
    return (x + m - 1) // m * m


def negative_binomial_forward(h, w_mu, b_mu, w_sigma, b_sigma, *, tb_max=1024):
    """DeepAR NegativeBinomial projection head.

    Args:
      h:        (B, H) float32 hidden states.
      w_mu:     (1, H) float32 (torch nn.Linear weight layout).
      b_mu:     (1,)   float32.
      w_sigma:  (1, H) float32.
      b_sigma:  (1,)   float32.
    Returns:
      (mu_t, alpha_t), each (B, 1) float32.
    """
    B, H = h.shape

    # Fuse the two heads (tiny wrapper-side ops): one (H, 2) weight, one (2,) bias.
    w_fused = jnp.concatenate([w_mu, w_sigma], axis=0).T.astype(h.dtype)    # (H, 2)
    b_fused = jnp.concatenate([b_mu, b_sigma], axis=0).astype(jnp.float32)  # (2,)

    # Batch tiling: one tile for small B, 1024-row tiles otherwise.
    # 1024 x 64 f32 = 256 KiB per buffer -> fits VMEM double-buffered on every
    # generation (v5e/v6e/v7x).  tb is a multiple of 8 and, in the multi-tile
    # case, of 128 so the (2, tb) output block is lane-dense.
    if B <= tb_max:
        tb = _round_up(B, 8)
        b_pad = tb
    else:
        tb = tb_max
        b_pad = _round_up(B, tb)

    if b_pad != B:
        h = jnp.pad(h, ((0, b_pad - B), (0, 0)))

    grid = (b_pad // tb,)

    cost = pl.CostEstimate(
        flops=2 * b_pad * H * 2 + 8 * b_pad,
        transcendentals=4 * b_pad,                                  # exp + log per head per row
        bytes_accessed=b_pad * H * 4 + (H * 2 + 2) * 4 + 2 * b_pad * 4,
    )

    out = pl.pallas_call(
        _negbin_kernel,
        out_shape=jax.ShapeDtypeStruct((2, b_pad), h.dtype),
        grid_spec=pltpu.PrefetchScalarGridSpec(
            num_scalar_prefetch=0,
            grid=grid,
            in_specs=[
                pl.BlockSpec((tb, H), lambda i: (i, 0)),               # streamed h tiles
                pl.BlockSpec((H, 2), lambda i: (0, 0)),                # resident fused weight
                pl.BlockSpec(memory_space=pltpu.MemorySpace.SMEM),     # fused bias scalars
            ],
            out_specs=pl.BlockSpec((2, tb), lambda i: (0, i)),         # lane-dense output slab
        ),
        compiler_params=pltpu.CompilerParams(
            dimension_semantics=("parallel",)),                        # shard tiles across TCs
        cost_estimate=cost,
    )(h, w_fused, b_fused)

    out = out[:, :B]                      # drop batch padding
    mu_t = out[0].reshape(B, 1)
    alpha_t = out[1].reshape(B, 1)
    return mu_t, alpha_t


def _init_linear(key, fan_in, fan_out):
    """nn.Linear default init: U(-1/sqrt(fan_in), 1/sqrt(fan_in)); torch layout."""
    kw, kb = jax.random.split(key)
    bound = 1.0 / jnp.sqrt(jnp.float32(fan_in))
    w = jax.random.uniform(kw, (fan_out, fan_in), jnp.float32, -bound, bound)
    b = jax.random.uniform(kb, (fan_out,), jnp.float32, -bound, bound)
    return w, b


def _reference(h, w_mu, b_mu, w_sigma, b_sigma):
    mu = jnp.log(1.0 + jnp.exp(h @ w_mu.T + b_mu))
    alpha = jnp.log(1.0 + jnp.exp(h @ w_sigma.T + b_sigma)) + 1e-05
    return mu, alpha


if __name__ == "__main__":
    # params: lstm_hidden_dim=32, lstm_layers=2 -> input feature dim = 64
    lstm_hidden_dim, lstm_layers = 32, 2
    hidden = lstm_hidden_dim * lstm_layers

    key = jax.random.PRNGKey(0)
    k_h, k_mu, k_sig, k_h2 = jax.random.split(key, 4)
    w_mu, b_mu = _init_linear(k_mu, hidden, 1)
    w_sigma, b_sigma = _init_linear(k_sig, hidden, 1)

    # Small demo batch (single-tile path).
    batch = 8
    h = jax.random.normal(k_h, (batch, hidden), jnp.float32)
    mu_t, alpha_t = negative_binomial_forward(h, w_mu, b_mu, w_sigma, b_sigma)
    jax.block_until_ready((mu_t, alpha_t))
    mu_ref, alpha_ref = _reference(h, w_mu, b_mu, w_sigma, b_sigma)
    assert mu_t.shape == (batch, 1) and alpha_t.shape == (batch, 1)
    assert jnp.allclose(mu_t, mu_ref, atol=1e-5, rtol=1e-5)
    assert jnp.allclose(alpha_t, alpha_ref, atol=1e-5, rtol=1e-5)

    # Larger batch exercising the multi-tile + batch-padding path.
    batch2 = 1500
    h2 = jax.random.normal(k_h2, (batch2, hidden), jnp.float32)
    mu2, alpha2 = negative_binomial_forward(h2, w_mu, b_mu, w_sigma, b_sigma)
    jax.block_until_ready((mu2, alpha2))
    mu2_ref, alpha2_ref = _reference(h2, w_mu, b_mu, w_sigma, b_sigma)
    assert mu2.shape == (batch2, 1) and alpha2.shape == (batch2, 1)
    assert jnp.allclose(mu2, mu2_ref, atol=1e-5, rtol=1e-5)
    assert jnp.allclose(alpha2, alpha2_ref, atol=1e-5, rtol=1e-5)

    print("KERNEL_OK")
</pallas_src>

<mosaic_0001>
module attributes {stable_mosaic.version = 11 : i64} {
  func.func @_negbin_kernel(%arg0: i32, %arg1: memref<8x64xf32, #tpu.memory_space<vmem>>, %arg2: memref<64x2xf32, #tpu.memory_space<vmem>>, %arg3: memref<2xf32, #tpu.memory_space<smem>>, %arg4: memref<2x8xf32, #tpu.memory_space<vmem>>) attributes {dimension_semantics = [#tpu.dimension_semantics<parallel>], iteration_bounds = array<i64: 1>, scalar_prefetch = 0 : i64, scratch_operands = 0 : i64, tpu.core_type = #tpu.core_type<tc>, window_params = [{transform_indices = @transform_0, window_bounds = array<i64: 8, 64>}, {pipeline_mode = #tpu.pipeline_mode<synchronous>, transform_indices = @transform_1, window_bounds = array<i64: 64, 2>}, {transform_indices = @transform_2, window_bounds = array<i64: 2>}, {transform_indices = @transform_3, window_bounds = array<i64: 2, 8>}]} {
    %c0 = arith.constant 0 : index
    %c0_0 = arith.constant 0 : index
    %0 = vector.load %arg1[%c0, %c0_0] : memref<8x64xf32, #tpu.memory_space<vmem>>, vector<8x64xf32>
    %c0_1 = arith.constant 0 : index
    %c0_2 = arith.constant 0 : index
    %1 = vector.load %arg2[%c0_1, %c0_2] : memref<64x2xf32, #tpu.memory_space<vmem>>, vector<64x2xf32>
    %cst = arith.constant dense<0.000000e+00> : vector<8x2xf32>
    %2 = tpu.matmul %0, %1, %cst {dimension_numbers = #tpu.dot_dimension_numbers<[1], [0], [0], [1], [0, 0, 1, 1], [], []>} : vector<8x64xf32>, vector<64x2xf32>, vector<8x2xf32> -> vector<8x2xf32>
    %3 = tpu.transpose %2, [1, 0] : vector<8x2xf32> -> vector<2x8xf32>
    %4 = tpu.iota {dimensions = array<i32: 0>} : vector<2x1xi32>
    %c0_i32 = arith.constant 0 : i32
    %5 = vector.broadcast %c0_i32 : i32 to vector<2x1xi32>
    %6 = arith.cmpi eq, %4, %5 : vector<2x1xi32>
    %c0_3 = arith.constant 0 : index
    %7 = memref.load %arg3[%c0_3] : memref<2xf32, #tpu.memory_space<smem>>
    %c1 = arith.constant 1 : index
    %8 = memref.load %arg3[%c1] : memref<2xf32, #tpu.memory_space<smem>>
    %9 = vector.broadcast %7 : f32 to vector<2x1xf32>
    %10 = vector.broadcast %8 : f32 to vector<2x1xf32>
    %11 = arith.select %6, %9, %10 : vector<2x1xi1>, vector<2x1xf32>
    %c0_i32_4 = arith.constant 0 : i32
    %12 = vector.broadcast %c0_i32_4 : i32 to vector<2x1xi32>
    %13 = arith.cmpi eq, %4, %12 : vector<2x1xi32>
    %cst_5 = arith.constant 0.000000e+00 : f32
    %cst_6 = arith.constant 9.99999974E-6 : f32
    %14 = vector.broadcast %cst_5 : f32 to vector<2x1xf32>
    %15 = vector.broadcast %cst_6 : f32 to vector<2x1xf32>
    %16 = arith.select %13, %14, %15 : vector<2x1xi1>, vector<2x1xf32>
    %17 = vector.broadcast %11 : vector<2x1xf32> to vector<2x8xf32>
    %18 = arith.addf %3, %17 : vector<2x8xf32>
    %cst_7 = arith.constant 0.000000e+00 : f32
    %19 = vector.broadcast %cst_7 : f32 to vector<2x8xf32>
    %20 = arith.maximumf %18, %19 : vector<2x8xf32>
    %21 = math.absf %18 : vector<2x8xf32>
    %cst_8 = arith.constant 0.000000e+00 : f32
    %22 = vector.broadcast %cst_8 : f32 to vector<2x8xf32>
    %23 = arith.subf %22, %21 : vector<2x8xf32>
    %24 = math.exp %23 : vector<2x8xf32>
    %cst_9 = arith.constant 1.000000e+00 : f32
    %25 = vector.broadcast %cst_9 : f32 to vector<2x8xf32>
    %26 = arith.addf %25, %24 : vector<2x8xf32>
    %27 = math.log %26 : vector<2x8xf32>
    %28 = arith.addf %20, %27 : vector<2x8xf32>
    %29 = vector.broadcast %16 : vector<2x1xf32> to vector<2x8xf32>
    %30 = arith.addf %28, %29 : vector<2x8xf32>
    %c0_10 = arith.constant 0 : index
    %c0_11 = arith.constant 0 : index
    %31 = vector.load %arg4[%c0_10, %c0_11] : memref<2x8xf32, #tpu.memory_space<vmem>>, vector<2x8xf32>
    tpu.vector_store %arg4[%c0_10, %c0_11], %30 {strides = array<i32>} : memref<2x8xf32, #tpu.memory_space<vmem>>, vector<2x8xf32>,
    return
  }
  func.func @transform_0(%arg0: i32) -> (i32, i32) {
    %c0_i32 = arith.constant 0 : i32
    %c0_i32_0 = arith.constant 0 : i32
    return %arg0, %c0_i32 : i32, i32
  }
  func.func @transform_1(%arg0: i32) -> (i32, i32) {
    %c0_i32 = arith.constant 0 : i32
    %c0_i32_0 = arith.constant 0 : i32
    %c0_i32_1 = arith.constant 0 : i32
    return %c0_i32, %c0_i32_0 : i32, i32
  }
  func.func @transform_2(%arg0: i32) -> i32 {
    %c0_i32 = arith.constant 0 : i32
    %c0_i32_0 = arith.constant 0 : i32
    return %c0_i32 : i32
  }
  func.func @transform_3(%arg0: i32) -> (i32, i32) {
    %c0_i32 = arith.constant 0 : i32
    %c0_i32_0 = arith.constant 0 : i32
    return %c0_i32, %arg0 : i32, i32
  }
}

</mosaic_0001>

<llo_original>
// kernel: tpu_custom_call.1
$region0: #{tpu_custom_call.1}
  #allocation0 [shape = 'u32[]', space=smem, size = 0x4, offset = 0x4, fixed_abs, tag = 'smem constant byte address 0x4 - core index']
  #allocation1 [shape = 'u32[144,128]{1,0:T(1,128)}', space=vmem, size = 0x12000, scoped, tag = 'internal scratch']
  %s0 = inlined_call_operand.vmem [shape: f32[8,64], index: 0, kind: input, shape index: {}]
  %s1 = inlined_call_operand.vmem [shape: f32[64,2], index: 1, kind: input, shape index: {}]
  %s2 = inlined_call_operand.vmem [shape: f32[2], index: 2, kind: input, shape index: {}]
  %s3 = inlined_call_operand.hbm [shape: f32[2,8], index: 3, kind: output, shape index: {}]
  %s4 = sld [smem:[#allocation0]]
  $region26: #{tpu_custom_call.1} parent=0
    _
  %s6 = ssub.s32 1, %s4
  %s7 = scalar_select 0, %s6, %s4
  $region1: #{tpu_custom_call.1} parent=0
    #allocation2 [shape = 'u8[512]{0}', space=smem, size = 0x200, scoped, tag = 'input window, operand 2, single buffered']
    #allocation3 [shape = 's32[1]{0}', space=sflag, size = 0x4, scoped, tag = 'scoped memory for tpu_custom_call.1']
    #allocation4 [shape = 's32[1]{0}', space=sflag, size = 0x4, scoped, tag = 'scoped memory for tpu_custom_call.1']
    #allocation5 [shape = 'u8[1024]{0}', space=vmem, size = 0x400, scoped, tag = 'output window, operand 0, single buffered']
    %8 = vsyncpa [#allocation4], 0
    %9 = vsyncpa [#allocation3], 0
    // Predicated region
    $region2: #{tpu_custom_call.1} parent=1 // pred_check
      _
    $region3: #{tpu_custom_call.1} parent=1 // pred_check_branch
      %11 = sbr.rel (0) target = $region5
    $region4: #{tpu_custom_call.1} parent=1 // pred_region
      _
    $region5: #{tpu_custom_call.1} parent=1 // pred_fallthru
      _
    // Predicated region
    $region6: #{tpu_custom_call.1} parent=1 // pred_check
      _
    $region7: #{tpu_custom_call.1} parent=1 // pred_check_branch
      %13 = sbr.rel (0) target = $region9
    $region8: #{tpu_custom_call.1} parent=1 // pred_region
      _
    $region9: #{tpu_custom_call.1} parent=1 // pred_fallthru
      _
    // Predicated region
    $region10: #{tpu_custom_call.1} parent=1 // pred_check
      _
    $region11: #{tpu_custom_call.1} parent=1 // pred_check_branch
      %15 = sbr.rel (0) target = $region13
    $region12: #{tpu_custom_call.1} parent=1 // pred_region
      %s17 = ssub.s32 16, 16
      %18 = vsyncadd [#allocation4], %s17
      %s20 = sshll.u32 %s2, 4
      %s21 = int_to_ptr.vmem [resolvable:$true] %s20
      %23 = dma.vmem_to_smem %s21, 16, [#allocation2], [#allocation4]
    $region13: #{tpu_custom_call.1} parent=1 // pred_fallthru
      _
    // Predicated region
    $region14: #{tpu_custom_call.1} parent=1 // pred_check
      _
    $region15: #{tpu_custom_call.1} parent=1 // pred_check_branch
      %25 = sbr.rel (0) target = $region17
    $region16: #{tpu_custom_call.1} parent=1 // pred_region
      %26 = dma.done [#allocation4], 16
    $region17: #{tpu_custom_call.1} parent=1 // pred_fallthru
      _
    %27 = sfence
    %v28 = vld [vmem:[%s0] sm:$0xff]
    %v29 = vld [vmem:[%s1] sm:$0xff]
    %v30 = vld [vmem:[%s1 + $0x8] sm:$0xff]
    %v31 = vld [vmem:[%s1 + $0x10] sm:$0xff]
    %v32 = vld [vmem:[%s1 + $0x18] sm:$0xff]
    %v33 = vld [vmem:[%s1 + $0x20] sm:$0xff]
    %v34 = vld [vmem:[%s1 + $0x28] sm:$0xff]
    %v35 = vld [vmem:[%s1 + $0x30] sm:$0xff]
    %v36 = vld [vmem:[%s1 + $0x38] sm:$0xff]
    %vm37 = vcmask 523264
    %v39 = vsel %vm37, %v28, 0
    %41 = vmatprep.subr.mxu0 0.0
    %42 = vmatpush1.msra.mxu0 0.0
    %43 = vmatprep.subr.mxu0 0.0
    %44 = vmatpush1.msra.mxu0 0.0
    %45 = vmatprep.subr.mxu0 0.0
    %46 = vmatpush1.msra.mxu0 0.0
    %47 = vmatprep.subr.mxu0 0.0
    %48 = vmatpush1.msra.mxu0 0.0
    %49 = vmatprep.subr.mxu0 0.0
    %50 = vmatpush1.msra.mxu0 0.0
    %51 = vmatprep.subr.mxu0 0.0
    %52 = vmatpush1.msra.mxu0 0.0
    %53 = vmatprep.subr.mxu0 0.0
    %54 = vmatpush1.msra.mxu0 0.0
    %55 = vmatprep.subr.mxu0 0.0
    %56 = vmatpush1.msra.mxu0 0.0
    %57 = vmatprep.subr.mxu0 0.0
    %58 = vmatpush1.msra.mxu0 %v36
    %59 = vmatprep.subr.mxu0 0.0
    %60 = vmatpush1.msra.mxu0 %v35
    %61 = vmatprep.subr.mxu0 0.0
    %62 = vmatpush1.msra.mxu0 %v34
    %63 = vmatprep.subr.mxu0 0.0
    %64 = vmatpush1.msra.mxu0 %v33
    %65 = vmatprep.subr.mxu0 0.0
    %66 = vmatpush1.msra.mxu0 %v32
    %67 = vmatprep.subr.mxu0 0.0
    %68 = vmatpush1.msra.mxu0 %v31
    %69 = vmatprep.subr.mxu0 0.0
    %70 = vmatpush1.msra.mxu0 %v30
    %71 = vmatprep.subr.mxu0 0.0
    %72 = vmatpush1.msra.mxu0 %v29
    %73 = vmatprep.subr.mxu0 0.0
    %74 = vmatpush2.msra.mxu0 0.0
    %75 = vmatprep.subr.mxu0 0.0
    %76 = vmatpush2.msra.mxu0 0.0
    %77 = vmatprep.subr.mxu0 0.0
    %78 = vmatpush2.msra.mxu0 0.0
    %79 = vmatprep.subr.mxu0 0.0
    %80 = vmatpush2.msra.mxu0 0.0
    %81 = vmatprep.subr.mxu0 0.0
    %82 = vmatpush2.msra.mxu0 0.0
    %83 = vmatprep.subr.mxu0 0.0
    %84 = vmatpush2.msra.mxu0 0.0
    %85 = vmatprep.subr.mxu0 0.0
    %86 = vmatpush2.msra.mxu0 0.0
    %87 = vmatprep.subr.mxu0 0.0
    %88 = vmatpush2.msra.mxu0 0.0
    %89 = vmatprep.subr.mxu0 0.0
    %90 = vmatpush2.msra.mxu0 0.0
    %91 = vmatprep.subr.mxu0 0.0
    %92 = vmatpush2.msra.mxu0 0.0
    %93 = vmatprep.subr.mxu0 0.0
    %94 = vmatpush2.msra.mxu0 0.0
    %95 = vmatprep.subr.mxu0 0.0
    %96 = vmatpush2.msra.mxu0 0.0
    %97 = vmatprep.subr.mxu0 0.0
    %98 = vmatpush2.msra.mxu0 0.0
    %99 = vmatprep.subr.mxu0 0.0
    %100 = vmatpush2.msra.mxu0 0.0
    %101 = vmatprep.subr.mxu0 0.0
    %102 = vmatpush2.msra.mxu0 0.0
    %103 = vmatprep.subr.mxu0 0.0
    %104 = vmatpush2.msra.mxu0 0.0
    %105 = vmatprep.mubr.f32.mxu0 0.0
    %106 = vmatmul.mubr.f32.gmra.mxu0 %v39
    %v107 = vpop.f32.mrf.mxu0
    %v108 = vadd.f32 0.0, %v107
    %v109 = vpop.f32.mrf.mxu0
    %110 = vdwg.mxu0
    %111 = vxpose.xlu0.b32.start [1/16] %v108, 128
    %112 = vxpose.xlu0.b32.cont [2/16] 0.0, 128
    %113 = vxpose.xlu0.b32.cont [3/16] 0.0, 128
    %114 = vxpose.xlu0.b32.cont [4/16] 0.0, 128
    %115 = vxpose.xlu0.b32.cont [5/16] 0.0, 128
    %116 = vxpose.xlu0.b32.cont [6/16] 0.0, 128
    %117 = vxpose.xlu0.b32.cont [7/16] 0.0, 128
    %118 = vxpose.xlu0.b32.cont [8/16] 0.0, 128
    %119 = vxpose.xlu0.b32.cont [9/16] 0.0, 128
    %120 = vxpose.xlu0.b32.cont [10/16] 0.0, 128
    %121 = vxpose.xlu0.b32.cont [11/16] 0.0, 128
    %122 = vxpose.xlu0.b32.cont [12/16] 0.0, 128
    %123 = vxpose.xlu0.b32.cont [13/16] 0.0, 128
    %124 = vxpose.xlu0.b32.cont [14/16] 0.0, 128
    %125 = vxpose.xlu0.b32.cont [15/16] 0.0, 128
    %126 = vxpose.xlu0.b32.end [16/16] 0.0, 128
    %v127 = vpop.trf.xlu0
    %v128 = vpop.trf.xlu0
    %v129 = vpop.trf.xlu0
    %v130 = vpop.trf.xlu0
    %v131 = vpop.trf.xlu0
    %v132 = vpop.trf.xlu0
    %v133 = vpop.trf.xlu0
    %v134 = vpop.trf.xlu0
    %v135 = vpop.trf.xlu0
    %v136 = vpop.trf.xlu0
    %v137 = vpop.trf.xlu0
    %v138 = vpop.trf.xlu0
    %v139 = vpop.trf.xlu0
    %v140 = vpop.trf.xlu0
    %v141 = vpop.trf.xlu0
    %v142 = vpop.trf.xlu0
    %v143 = vlaneseq
    %v144 = vshrl.u32 %v143, 7
    %vm145 = vcmp.eq.s32.totalorder %v144, 0
    %s146 = sld [smem:[#allocation2]]
    %s147 = sld [smem:[#allocation2 + $0x1]]
    %v148 = vstv %s146
    %v149 = vstv %s147
    %v150 = vsel %vm145, %v148, %v149
    %v151 = vsel %vm145, 0.0, 1e-05
    %v152 = vadd.f32 %v127, %v150
    %v153 = vmax.f32 %v152, 0.0
    %v154 = vand.u32 2147483647, %v152
    %v155 = vsub.f32 0.0, %v154
    %v156 = vmul.f32 %v155, 1.442695
    %v157 = vpow.pop %v156
    %v158 = vadd.f32 %v157, 1.0
    %v159 = vlog2.pop %v158
    %v160 = vmul.f32 %v159, 0.6931472
    %v161 = vadd.f32 %v153, %v160
    %v162 = vadd.f32 %v161, %v151
    %vm163 = vcmask 58368
    %164 = vst.msk [vmem:[#allocation5] sm:$0x3] %vm163, %v162
    // Predicated region
    $region18: #{tpu_custom_call.1} parent=1 // pred_check
      _
    $region19: #{tpu_custom_call.1} parent=1 // pred_check_branch
      %166 = sbr.rel (0) target = $region21
    $region20: #{tpu_custom_call.1} parent=1 // pred_region
      %s168 = ssub.s32 32, 32
      %169 = vsyncadd [#allocation3], %s168
      %s171 = sshll.u32 [#allocation5], 4
      %s172 = int_to_ptr.vmem [resolvable:$true] %s171
      %174 = dma.vmem_to_hbm [thread:$0]  %s172, 32, %s3, [#allocation3]
    $region21: #{tpu_custom_call.1} parent=1 // pred_fallthru
      _
    // Predicated region
    $region22: #{tpu_custom_call.1} parent=1 // pred_check
      _
    $region23: #{tpu_custom_call.1} parent=1 // pred_check_branch
      %176 = sbr.rel (0) target = $region25
    $region24: #{tpu_custom_call.1} parent=1 // pred_region
      %177 = dma.done [#allocation3], 32
    $region25: #{tpu_custom_call.1} parent=1 // pred_fallthru
      _
    %178 = vsyncpa [#allocation3], 1
    %179 = vsyncpa [#allocation4], 1

</llo_original>
